<compile_context>
chip_gen: v7x
topology: tpu7x:2x2x1
jax: 0.10.0
libtpu: 0.0.40
codegen_flags: <defaults>
</compile_context>

<pallas_src>
import functools

import jax
import jax.numpy as jnp
from jax.experimental import pallas as pl
from jax.experimental.pallas import tpu as pltpu


_LANE_GROUP = 8 * 128            # tile granularity: 8 sublanes x 128 lanes
_TILE_LANES_MAX = 256 * 1024     # max anchors per grid step (5 MiB / input block)
_MIN_SPLIT_LANES = 64 * 1024     # never split into tiles smaller than this


def _round_up(x, m):
    return ((x + m - 1) // m) * m


def _cdiv(a, b):
    return (a + b - 1) // b


def _rpn_regr_loss_kernel(slab_ref, out_ref, *, sigma):
    # slab_ref: (5, rows, 128) = [cls, dy_true, dh_true, dy_pred, dh_pred]
    #           channels, anchors dense over (sublane=rows, lane=128).
    # out_ref : (1, 2, 8, 128) per-tile partials [masked loss, positive mask].
    cls = slab_ref[0]                       # (rows, 128)
    dy_t = slab_ref[1]
    dh_t = slab_ref[2]
    dy_p = slab_ref[3]
    dh_p = slab_ref[4]

    inv_sigma = 1.0 / sigma
    half_inv_sigma = 0.5 / sigma
    half_sigma = 0.5 * sigma

    d_dy = jnp.abs(dy_t - dy_p)                                        # (rows, 128)
    d_dh = jnp.abs(dh_t - dh_p)
    l_dy = jnp.where(d_dy < inv_sigma, half_sigma * d_dy * d_dy,
                     d_dy - half_inv_sigma)
    l_dh = jnp.where(d_dh < inv_sigma, half_sigma * d_dh * d_dh,
                     d_dh - half_inv_sigma)
    row_loss = l_dy + l_dh                                             # VALU add

    mask = (cls == 1.0).astype(jnp.float32)                            # (rows, 128)
    masked = row_loss * mask

    rows = masked.shape[0]                  # multiple of 8 by construction
    g = rows // 8
    # Fold the rows axis with pure VALU vreg adds into an (8,128) accumulator;
    # only the wrapper's tiny post-reduction ever touches the XLU.
    out_ref[0, 0, :, :] = jnp.sum(masked.reshape(g, 8, 128), axis=0)
    out_ref[0, 1, :, :] = jnp.sum(mask.reshape(g, 8, 128), axis=0)


def rpn_regr_loss(y_pred, y_true, sigma=9.0, *,
                  tile_lanes_max=_TILE_LANES_MAX,
                  min_split_lanes=_MIN_SPLIT_LANES):
    """y_pred: (1, N, 2) predictions; y_true: (1, N, 3) = [cls, dy, dh]."""
    n = y_true.shape[1]

    # --- Tile sizing (anchor axis, in lanes) -----------------------------
    n_grp = _round_up(n, _LANE_GROUP)
    if n_grp <= 2 * min_split_lanes:
        num_tiles = 1                        # small slab: one tile, no split
    else:
        # Even tile count >= 2 so v7x's two TensorCores each stream half of
        # the parallel grid; cap per-tile size to bound VMEM.
        num_tiles = max(2, _cdiv(n_grp, tile_lanes_max))
        num_tiles = _round_up(num_tiles, 2)
    tile_n = _round_up(_cdiv(n_grp, num_tiles), _LANE_GROUP)
    n_pad = tile_n * num_tiles
    rows_per_tile = tile_n // 128            # multiple of 8

    # --- Channels-first slab (single XLA relayout pass) ------------------
    targ = y_true[0].astype(jnp.float32)                               # (N, 3)
    pred = y_pred[0].astype(jnp.float32)                               # (N, 2)
    slab = jnp.transpose(jnp.concatenate([targ, pred], axis=1), (1, 0))  # (5, N)
    if n_pad != n:
        slab = jnp.pad(slab, ((0, 0), (0, n_pad - n)))   # padded anchors: cls=0
    slab = slab.reshape(5, n_pad // 128, 128)            # zero-copy lane-major view

    kernel = functools.partial(_rpn_regr_loss_kernel, sigma=float(sigma))
    partials = pl.pallas_call(
        kernel,
        out_shape=jax.ShapeDtypeStruct((num_tiles, 2, 8, 128), jnp.float32),
        grid=(num_tiles,),
        in_specs=[pl.BlockSpec((5, rows_per_tile, 128), lambda i: (0, i, 0))],
        out_specs=pl.BlockSpec((1, 2, 8, 128), lambda i: (i, 0, 0, 0)),
        compiler_params=pltpu.CompilerParams(
            dimension_semantics=("parallel",),
            vmem_limit_bytes=48 * 1024 * 1024),
        cost_estimate=pl.CostEstimate(
            flops=20 * n_pad,
            transcendentals=0,
            bytes_accessed=5 * 4 * n_pad + num_tiles * 2 * 8 * 128 * 4),
    )(slab)

    s = jnp.sum(partials[:, 0])
    c = jnp.sum(partials[:, 1])
    # mean over positive rows; 0.0 when there are no positives (torch fallback)
    return jnp.where(c > 0.0, s / jnp.maximum(c, 1.0), jnp.float32(0.0))


def _reference_loss(y_pred, y_true, sigma=9.0):
    """Pure-JAX reference (same masked-mean formulation as the torch module)."""
    cls = y_true[0, :, 0]
    regr_true = y_true[0, :, 1:3]
    regr_pred = y_pred[0]
    diff = jnp.abs(regr_true - regr_pred)
    less_one = (diff < 1.0 / sigma).astype(jnp.float32)
    loss = less_one * 0.5 * diff ** 2 * sigma + jnp.abs(1.0 - less_one) * (diff - 0.5 / sigma)
    row_loss = jnp.sum(loss, axis=1)
    mask = (cls == 1.0).astype(jnp.float32)
    c = jnp.sum(mask)
    return jnp.where(c > 0.0, jnp.sum(row_loss * mask) / jnp.maximum(c, 1.0), 0.0)


def _make_inputs(key, n, pos_frac=0.25):
    k_cls, k_regr, k_pred = jax.random.split(key, 3)
    cls = (jax.random.uniform(k_cls, (n,)) < pos_frac).astype(jnp.float32)
    regr = jax.random.normal(k_regr, (n, 2), dtype=jnp.float32)
    y_true = jnp.concatenate([cls[:, None], regr], axis=1)[None, :, :]   # (1, N, 3)
    y_pred = jax.random.normal(k_pred, (1, n, 2), dtype=jnp.float32)     # (1, N, 2)
    return y_pred, y_true


if __name__ == "__main__":
    key = jax.random.PRNGKey(0)
    k1, k2 = jax.random.split(key)

    loss_fn = jax.jit(
        rpn_regr_loss,
        static_argnames=("sigma", "tile_lanes_max", "min_split_lanes"))

    # Test 1: small N, not a multiple of 128 (single tile, tail padding).
    y_pred, y_true = _make_inputs(k1, 300)
    loss = jax.block_until_ready(loss_fn(y_pred, y_true))
    ref = jax.block_until_ready(_reference_loss(y_pred, y_true))
    assert jnp.allclose(loss, ref, rtol=1e-5, atol=1e-5), (loss, ref)

    # Test 2: zero-positive path -> loss must be exactly 0.0 (torch fallback).
    y_true_neg = y_true.at[:, :, 0].set(0.0)
    loss0 = jax.block_until_ready(loss_fn(y_pred, y_true_neg))
    assert jnp.allclose(loss0, 0.0), loss0

    # Test 3: force the multi-tile / parallel-grid path with small tiles.
    y_pred3, y_true3 = _make_inputs(k2, 4000)
    loss3 = jax.block_until_ready(
        loss_fn(y_pred3, y_true3, tile_lanes_max=1024, min_split_lanes=1024))
    ref3 = jax.block_until_ready(_reference_loss(y_pred3, y_true3))
    assert jnp.allclose(loss3, ref3, rtol=1e-5, atol=1e-5), (loss3, ref3)

    print("KERNEL_OK")
</pallas_src>

<mosaic_0001>
module attributes {stable_mosaic.version = 11 : i64} {
  func.func @_rpn_regr_loss_kernel(%arg0: i32, %arg1: memref<5x8x128xf32, #tpu.memory_space<vmem>>, %arg2: memref<1x2x8x128xf32, #tpu.memory_space<vmem>>) attributes {dimension_semantics = [#tpu.dimension_semantics<parallel>], iteration_bounds = array<i64: 1>, scalar_prefetch = 0 : i64, scratch_operands = 0 : i64, tpu.core_type = #tpu.core_type<tc>, window_params = [{transform_indices = @transform_0, window_bounds = array<i64: 5, 8, 128>}, {transform_indices = @transform_1, window_bounds = array<i64: 1, 2, 8, 128>}]} {
    %c0 = arith.constant 0 : index
    %c0_0 = arith.constant 0 : index
    %c0_1 = arith.constant 0 : index
    %0 = vector.load %arg1[%c0, %c0_0, %c0_1] : memref<5x8x128xf32, #tpu.memory_space<vmem>>, vector<1x8x128xf32>
    %1 = vector.shape_cast %0 : vector<1x8x128xf32> to vector<8x128xf32>
    %c1 = arith.constant 1 : index
    %c0_2 = arith.constant 0 : index
    %c0_3 = arith.constant 0 : index
    %2 = vector.load %arg1[%c1, %c0_2, %c0_3] : memref<5x8x128xf32, #tpu.memory_space<vmem>>, vector<1x8x128xf32>
    %3 = vector.shape_cast %2 : vector<1x8x128xf32> to vector<8x128xf32>
    %c2 = arith.constant 2 : index
    %c0_4 = arith.constant 0 : index
    %c0_5 = arith.constant 0 : index
    %4 = vector.load %arg1[%c2, %c0_4, %c0_5] : memref<5x8x128xf32, #tpu.memory_space<vmem>>, vector<1x8x128xf32>
    %5 = vector.shape_cast %4 : vector<1x8x128xf32> to vector<8x128xf32>
    %c3 = arith.constant 3 : index
    %c0_6 = arith.constant 0 : index
    %c0_7 = arith.constant 0 : index
    %6 = vector.load %arg1[%c3, %c0_6, %c0_7] : memref<5x8x128xf32, #tpu.memory_space<vmem>>, vector<1x8x128xf32>
    %7 = vector.shape_cast %6 : vector<1x8x128xf32> to vector<8x128xf32>
    %c4 = arith.constant 4 : index
    %c0_8 = arith.constant 0 : index
    %c0_9 = arith.constant 0 : index
    %8 = vector.load %arg1[%c4, %c0_8, %c0_9] : memref<5x8x128xf32, #tpu.memory_space<vmem>>, vector<1x8x128xf32>
    %9 = vector.shape_cast %8 : vector<1x8x128xf32> to vector<8x128xf32>
    %10 = arith.subf %3, %7 : vector<8x128xf32>
    %11 = math.absf %10 : vector<8x128xf32>
    %12 = arith.subf %5, %9 : vector<8x128xf32>
    %13 = math.absf %12 : vector<8x128xf32>
    %cst = arith.constant 0.111111112 : f32
    %14 = vector.broadcast %cst : f32 to vector<8x128xf32>
    %15 = arith.cmpf olt, %11, %14 : vector<8x128xf32>
    %cst_10 = arith.constant 4.500000e+00 : f32
    %16 = vector.broadcast %cst_10 : f32 to vector<8x128xf32>
    %17 = arith.mulf %16, %11 : vector<8x128xf32>
    %18 = arith.mulf %17, %11 : vector<8x128xf32>
    %cst_11 = arith.constant 0.055555556 : f32
    %19 = vector.broadcast %cst_11 : f32 to vector<8x128xf32>
    %20 = arith.subf %11, %19 : vector<8x128xf32>
    %21 = arith.select %15, %18, %20 : vector<8x128xi1>, vector<8x128xf32>
    %cst_12 = arith.constant 0.111111112 : f32
    %22 = vector.broadcast %cst_12 : f32 to vector<8x128xf32>
    %23 = arith.cmpf olt, %13, %22 : vector<8x128xf32>
    %cst_13 = arith.constant 4.500000e+00 : f32
    %24 = vector.broadcast %cst_13 : f32 to vector<8x128xf32>
    %25 = arith.mulf %24, %13 : vector<8x128xf32>
    %26 = arith.mulf %25, %13 : vector<8x128xf32>
    %cst_14 = arith.constant 0.055555556 : f32
    %27 = vector.broadcast %cst_14 : f32 to vector<8x128xf32>
    %28 = arith.subf %13, %27 : vector<8x128xf32>
    %29 = arith.select %23, %26, %28 : vector<8x128xi1>, vector<8x128xf32>
    %30 = arith.addf %21, %29 : vector<8x128xf32>
    %cst_15 = arith.constant 1.000000e+00 : f32
    %31 = vector.broadcast %cst_15 : f32 to vector<8x128xf32>
    %32 = arith.cmpf oeq, %1, %31 : vector<8x128xf32>
    %33 = arith.extui %32 : vector<8x128xi1> to vector<8x128xi32>
    %34 = arith.sitofp %33 : vector<8x128xi32> to vector<8x128xf32>
    %35 = arith.mulf %30, %34 : vector<8x128xf32>
    %36 = vector.shape_cast %35 : vector<8x128xf32> to vector<1x8x128xf32>
    %cst_16 = arith.constant dense<0.000000e+00> : vector<8x128xf32>
    %37 = vector.multi_reduction <add>, %36, %cst_16 [0] : vector<1x8x128xf32> to vector<8x128xf32>
    %c0_17 = arith.constant 0 : index
    %c0_18 = arith.constant 0 : index
    %c0_19 = arith.constant 0 : index
    %c0_20 = arith.constant 0 : index
    %38 = vector.load %arg2[%c0_17, %c0_18, %c0_19, %c0_20] : memref<1x2x8x128xf32, #tpu.memory_space<vmem>>, vector<1x1x8x128xf32>
    %39 = vector.shape_cast %38 : vector<1x1x8x128xf32> to vector<8x128xf32>
    %40 = vector.shape_cast %37 : vector<8x128xf32> to vector<1x1x8x128xf32>
    tpu.vector_store %arg2[%c0_17, %c0_18, %c0_19, %c0_20], %40 {strides = array<i32>} : memref<1x2x8x128xf32, #tpu.memory_space<vmem>>, vector<1x1x8x128xf32>,
    %41 = vector.shape_cast %34 : vector<8x128xf32> to vector<1x8x128xf32>
    %cst_21 = arith.constant dense<0.000000e+00> : vector<8x128xf32>
    %42 = vector.multi_reduction <add>, %41, %cst_21 [0] : vector<1x8x128xf32> to vector<8x128xf32>
    %c0_22 = arith.constant 0 : index
    %c1_23 = arith.constant 1 : index
    %c0_24 = arith.constant 0 : index
    %c0_25 = arith.constant 0 : index
    %43 = vector.load %arg2[%c0_22, %c1_23, %c0_24, %c0_25] : memref<1x2x8x128xf32, #tpu.memory_space<vmem>>, vector<1x1x8x128xf32>
    %44 = vector.shape_cast %43 : vector<1x1x8x128xf32> to vector<8x128xf32>
    %45 = vector.shape_cast %42 : vector<8x128xf32> to vector<1x1x8x128xf32>
    tpu.vector_store %arg2[%c0_22, %c1_23, %c0_24, %c0_25], %45 {strides = array<i32>} : memref<1x2x8x128xf32, #tpu.memory_space<vmem>>, vector<1x1x8x128xf32>,
    return
  }
  func.func @transform_0(%arg0: i32) -> (i32, i32, i32) {
    %c0_i32 = arith.constant 0 : i32
    %c0_i32_0 = arith.constant 0 : i32
    %c0_i32_1 = arith.constant 0 : i32
    return %c0_i32, %arg0, %c0_i32_0 : i32, i32, i32
  }
  func.func @transform_1(%arg0: i32) -> (i32, i32, i32, i32) {
    %c0_i32 = arith.constant 0 : i32
    %c0_i32_0 = arith.constant 0 : i32
    %c0_i32_1 = arith.constant 0 : i32
    %c0_i32_2 = arith.constant 0 : i32
    return %arg0, %c0_i32, %c0_i32_0, %c0_i32_1 : i32, i32, i32, i32
  }
}

</mosaic_0001>

<llo_original>
// kernel: rpn_regr_loss.1
$region0: #{rpn_regr_loss.1}
  #allocation0 [shape = 'u32[]', space=smem, size = 0x4, offset = 0x4, fixed_abs, tag = 'smem constant byte address 0x4 - core index']
  #allocation1 [shape = 'u32[144,128]{1,0:T(1,128)}', space=vmem, size = 0x12000, scoped, tag = 'internal scratch']
  %s0 = inlined_call_operand.vmem [shape: f32[5,8,128], index: 0, kind: input, shape index: {}]
  %s1 = inlined_call_operand.vmem [shape: f32[1,2,8,128], index: 1, kind: output, shape index: {}]
  %s2 = sld [smem:[#allocation0]]
  $region14: #{rpn_regr_loss.1} parent=0
    _
  %s4 = ssub.s32 1, %s2
  %s5 = scalar_select 0, %s4, %s2
  // Predicated region
  $region2: #{rpn_regr_loss.1} parent=0 // pred_check
    _
  $region3: #{rpn_regr_loss.1} parent=0 // pred_check_branch
    %7 = sbr.rel (0) target = $region5
  $region4: #{rpn_regr_loss.1} parent=0 // pred_region
    _
  $region5: #{rpn_regr_loss.1} parent=0 // pred_fallthru
    _
  %v8 = vld [vmem:[%s0] sm:$0xff]
  %s9 = scalar_lea.vmem %s0, 8
  %v10 = vld [vmem:[%s9] sm:$0xff]
  %s11 = scalar_lea.vmem %s0, 16
  %v12 = vld [vmem:[%s11] sm:$0xff]
  %s13 = scalar_lea.vmem %s0, 24
  %v14 = vld [vmem:[%s13] sm:$0xff]
  %s15 = scalar_lea.vmem %s0, 32
  %v16 = vld [vmem:[%s15] sm:$0xff]
  %v17 = vsub.f32 %v10, %v14
  %v18 = vand.u32 2147483647, %v17
  %v19 = vsub.f32 %v12, %v16
  %v20 = vand.u32 2147483647, %v19
  %vm21 = vcmp.lt.f32.partialorder %v18, 0.11111111
  %v22 = vmul.f32 %v18, 4.5
  %v23 = vmul.f32 %v22, %v18
  %v24 = vsub.f32 %v18, 0.055555556
  %v25 = vsel %vm21, %v23, %v24
  %vm26 = vcmp.lt.f32.partialorder %v20, 0.11111111
  %v27 = vmul.f32 %v20, 4.5
  %v28 = vmul.f32 %v27, %v20
  %v29 = vsub.f32 %v20, 0.055555556
  %v30 = vsel %vm26, %v28, %v29
  %v31 = vadd.f32 %v25, %v30
  %vm32 = vcmp.eq.f32.partialorder %v8, 1.0
  %v33 = vsel %vm32, 1, 0
  %v34 = vcvt.s32.f32 %v33
  %v35 = vmul.f32 %v31, %v34
  %v36 = vadd.f32 %v35, 0.0
  %37 = vst [vmem:[%s1] sm:$0xff] %v36
  %v38 = vadd.f32 %v34, 0.0
  %s39 = scalar_lea.vmem %s1, 8
  %40 = vst [vmem:[%s39] sm:$0xff] %v38
  // Predicated region
  $region6: #{rpn_regr_loss.1} parent=0 // pred_check
    _
  $region7: #{rpn_regr_loss.1} parent=0 // pred_check_branch
    %42 = sbr.rel (0) target = $region9
  $region8: #{rpn_regr_loss.1} parent=0 // pred_region
    _
  $region9: #{rpn_regr_loss.1} parent=0 // pred_fallthru
    _
  // Predicated region
  $region10: #{rpn_regr_loss.1} parent=0 // pred_check
    _
  $region11: #{rpn_regr_loss.1} parent=0 // pred_check_branch
    %44 = sbr.rel (0) target = $region13
  $region12: #{rpn_regr_loss.1} parent=0 // pred_region
    _
  $region13: #{rpn_regr_loss.1} parent=0 // pred_fallthru
    _

</llo_original>
